<compile_context>
chip_gen: v7x
topology: tpu7x:2x2x1
jax: 0.10.0
libtpu: 0.0.40
codegen_flags: <defaults>
</compile_context>

<pallas_src>
import functools

import jax
import jax.numpy as jnp
from jax.experimental import pallas as pl
from jax.experimental.pallas import tpu as pltpu

SMALL_BATCH_MAX = 2048   # <= this many rows: single full-array block, no grid
DEFAULT_BLOCK_B = 2048   # batch tile for the gridded path (multiple of 8)


def _batch_dim_semantics():
    """v7x has 2 TensorCores/chip: split the batch grid across them.

    On single-TC chips (v5e/v6e) plain "parallel" is a no-op but harmless.
    """
    try:
        kind = jax.devices()[0].device_kind.lower()
    except Exception:
        kind = ""
    if "v7" in kind:
        return (pltpu.CORE_PARALLEL,)
    return ("parallel",)


_BATCH_DIM_SEMANTICS = _batch_dim_semantics()


def mlp_kernel(x_ref, w1_ref, b1_ref, w2_ref, b2_ref, w3_ref, b3_ref, o_ref):
    """Fused 3-layer MLP on one batch tile.

    MXU operands are the weight dtype (bf16 by default); accumulation,
    bias-add and ReLU are f32 on the VPU. x arrives f32 and is cast in-kernel.
    """
    mm_dtype = w1_ref.dtype
    x = x_ref[...].astype(mm_dtype)          # in-kernel cast: free under MXU/DMA
    # Layer 1: x @ W1 + b1, ReLU
    h1 = jnp.dot(x, w1_ref[...], preferred_element_type=jnp.float32)
    h1 = jnp.maximum(h1 + b1_ref[...], 0.0).astype(mm_dtype)
    # Layer 2: h1 @ W2 + b2, ReLU
    h2 = jnp.dot(h1, w2_ref[...], preferred_element_type=jnp.float32)
    h2 = jnp.maximum(h2 + b2_ref[...], 0.0).astype(mm_dtype)
    # Layer 3: h2 @ W3 + b3 (no activation)
    out = jnp.dot(h2, w3_ref[...], preferred_element_type=jnp.float32)
    o_ref[...] = (out + b3_ref[...]).astype(o_ref.dtype)


def _cost_estimate(B, d_in, h1, h2, d_out, mm_bytes):
    flops = 2 * B * (d_in * h1 + h1 * h2 + h2 * d_out)
    bytes_accessed = (
        B * d_in * 4                                        # x (streamed f32)
        + (d_in * h1 + h1 * h2 + h2 * d_out) * mm_bytes     # weights (resident)
        + (h1 + h2 + d_out) * 4                             # biases (f32)
        + B * d_out * 4                                     # output (f32, un-padded)
    )
    return pl.CostEstimate(flops=flops, transcendentals=0,
                           bytes_accessed=bytes_accessed)


@functools.partial(jax.jit, static_argnames=("block_b", "use_bf16"))
def simple_nn_forward(x, w1, b1, w2, b2, w3, b3, *,
                      block_b=DEFAULT_BLOCK_B, use_bf16=True):
    B, d_in = x.shape
    h1_dim = w1.shape[1]
    h2_dim = w2.shape[1]
    d_out = w3.shape[1]

    # Weights -> MXU dtype, biases -> f32. No-ops if params were pre-prepared.
    mm_dtype = jnp.bfloat16 if use_bf16 else jnp.float32
    mm_bytes = 2 if use_bf16 else 4
    w1c, w2c, w3c = (w.astype(mm_dtype) for w in (w1, w2, w3))
    b1c, b2c, b3c = (b.astype(jnp.float32) for b in (b1, b2, b3))
    # x stays f32: cast happens inside the kernel (no extra HBM pass).

    ce = _cost_estimate(B, d_in, h1_dim, h2_dim, d_out, mm_bytes)

    if B <= SMALL_BATCH_MAX:
        # Single full-array block (block dims == array dims, so exempt from the
        # (8,128) divisibility rule). No padding, no grid.
        full = lambda a: pl.BlockSpec(a.shape, lambda: (0,) * a.ndim)
        out = pl.pallas_call(
            mlp_kernel,
            out_shape=jax.ShapeDtypeStruct((B, d_out), jnp.float32),
            in_specs=[full(x), full(w1c), full(b1c), full(w2c), full(b2c),
                      full(w3c), full(b3c)],
            out_specs=pl.BlockSpec((B, d_out), lambda: (0, 0)),
            cost_estimate=ce,
        )(x, w1c, b1c, w2c, b2c, w3c, b3c)
    else:
        # Batch grid: x / out pipelined HBM<->VMEM per tile, weights & biases
        # stay VMEM-resident (index_map always (0, 0)). Ragged last tile is
        # handled by the cdiv grid (out-of-bounds writes are masked; garbage
        # padded rows never mix into valid rows in a row-wise MLP).
        tb = block_b
        grid = (pl.cdiv(B, tb),)
        resident = lambda a: pl.BlockSpec(a.shape, lambda i: (0, 0))
        out = pl.pallas_call(
            mlp_kernel,
            out_shape=jax.ShapeDtypeStruct((B, d_out), jnp.float32),
            grid=grid,
            in_specs=[pl.BlockSpec((tb, d_in), lambda i: (i, 0)),
                      resident(w1c), resident(b1c),
                      resident(w2c), resident(b2c),
                      resident(w3c), resident(b3c)],
            out_specs=pl.BlockSpec((tb, d_out), lambda i: (i, 0)),
            compiler_params=pltpu.CompilerParams(
                dimension_semantics=_BATCH_DIM_SEMANTICS),
            cost_estimate=ce,
        )(x, w1c, b1c, w2c, b2c, w3c, b3c)

    return out


def prepare_params(params, use_bf16=True):
    """One-time weight-side prep (hoists per-call converts out of serving loop)."""
    mm_dtype = jnp.bfloat16 if use_bf16 else jnp.float32
    w1, b1, w2, b2, w3, b3 = params
    return [w1.astype(mm_dtype), b1.astype(jnp.float32),
            w2.astype(mm_dtype), b2.astype(jnp.float32),
            w3.astype(mm_dtype), b3.astype(jnp.float32)]


def init_params(key, input_dim, output_dim, hidden_dims=(128, 64)):
    """Deterministic init mimicking torch.nn.Linear (uniform(-1/sqrt(in), 1/sqrt(in)))."""
    dims = [input_dim, hidden_dims[0], hidden_dims[1], output_dim]
    params = []
    for i in range(3):
        key, kw, kb = jax.random.split(key, 3)
        fan_in = dims[i]
        bound = 1.0 / (fan_in ** 0.5)
        w = jax.random.uniform(kw, (dims[i], dims[i + 1]), jnp.float32, -bound, bound)
        b = jax.random.uniform(kb, (1, dims[i + 1]), jnp.float32, -bound, bound)
        params += [w, b]
    return params


def reference_forward(x, w1, b1, w2, b2, w3, b3, use_bf16=False):
    """Pure-JAX reference. use_bf16=False is the exact f32 PyTorch SimpleNN forward."""
    mm_dtype = jnp.bfloat16 if use_bf16 else jnp.float32
    h1 = jnp.dot(x.astype(mm_dtype), w1.astype(mm_dtype),
                 preferred_element_type=jnp.float32)
    h1 = jnp.maximum(h1 + b1.astype(jnp.float32), 0.0).astype(mm_dtype)
    h2 = jnp.dot(h1, w2.astype(mm_dtype), preferred_element_type=jnp.float32)
    h2 = jnp.maximum(h2 + b2.astype(jnp.float32), 0.0).astype(mm_dtype)
    out = jnp.dot(h2, w3.astype(mm_dtype), preferred_element_type=jnp.float32)
    return out + b3.astype(jnp.float32)


if __name__ == "__main__":
    key = jax.random.PRNGKey(0)
    batch, input_dim, output_dim = 8, 32, 4

    key, kx = jax.random.split(key)
    x = jax.random.normal(kx, (batch, input_dim), jnp.float32)
    params = init_params(key, input_dim, output_dim)
    params_bf16 = prepare_params(params, use_bf16=True)

    ref_f32 = reference_forward(x, *params, use_bf16=False)   # PyTorch-exact f32
    ref_bf16 = reference_forward(x, *params, use_bf16=True)

    # 1) Small batch, bf16 MXU path (single-block): tight vs bf16 ref, loose vs f32 ref.
    out_bf16 = jax.block_until_ready(simple_nn_forward(x, *params_bf16))
    assert out_bf16.shape == (batch, output_dim)
    assert jnp.allclose(out_bf16, ref_bf16, atol=1e-3, rtol=1e-3), \
        float(jnp.max(jnp.abs(out_bf16 - ref_bf16)))
    assert jnp.allclose(out_bf16, ref_f32, atol=5e-2, rtol=5e-2), \
        float(jnp.max(jnp.abs(out_bf16 - ref_f32)))

    # 2) Full-f32 path: exact parity with the original PyTorch module.
    out_f32 = jax.block_until_ready(simple_nn_forward(x, *params, use_bf16=False))
    assert jnp.allclose(out_f32, ref_f32, atol=1e-5, rtol=1e-5), \
        float(jnp.max(jnp.abs(out_f32 - ref_f32)))

    # 3) Large, non-tile-multiple batch: gridded path with a ragged last tile
    #    (5000 = 2*2048 + 904), resident weights, batch axis parallel/core-parallel.
    key, kx2 = jax.random.split(key)
    x_big = jax.random.normal(kx2, (5000, input_dim), jnp.float32)
    out_big = jax.block_until_ready(simple_nn_forward(x_big, *params_bf16))
    ref_big_bf16 = reference_forward(x_big, *params, use_bf16=True)
    ref_big_f32 = reference_forward(x_big, *params, use_bf16=False)
    assert out_big.shape == (5000, output_dim)
    assert jnp.allclose(out_big, ref_big_bf16, atol=1e-3, rtol=1e-3), \
        float(jnp.max(jnp.abs(out_big - ref_big_bf16)))
    assert jnp.allclose(out_big, ref_big_f32, atol=5e-2, rtol=5e-2), \
        float(jnp.max(jnp.abs(out_big - ref_big_f32)))

    print("KERNEL_OK")
</pallas_src>

<mosaic_0001>
module attributes {stable_mosaic.version = 11 : i64} {
  func.func @mlp_kernel(%arg0: memref<8x32xf32, #tpu.memory_space<vmem>>, %arg1: memref<32x128xbf16, #tpu.memory_space<vmem>>, %arg2: memref<1x128xf32, #tpu.memory_space<vmem>>, %arg3: memref<128x64xbf16, #tpu.memory_space<vmem>>, %arg4: memref<1x64xf32, #tpu.memory_space<vmem>>, %arg5: memref<64x4xbf16, #tpu.memory_space<vmem>>, %arg6: memref<1x4xf32, #tpu.memory_space<vmem>>, %arg7: memref<8x4xf32, #tpu.memory_space<vmem>>) attributes {dimension_semantics = [], scalar_prefetch = 0 : i64, scratch_operands = 0 : i64, tpu.core_type = #tpu.core_type<tc>} {
    %c0 = arith.constant 0 : index
    %c0_0 = arith.constant 0 : index
    %0 = vector.load %arg0[%c0, %c0_0] : memref<8x32xf32, #tpu.memory_space<vmem>>, vector<8x32xf32>
    %1 = arith.truncf %0 : vector<8x32xf32> to vector<8x32xbf16>
    %c0_1 = arith.constant 0 : index
    %c0_2 = arith.constant 0 : index
    %2 = vector.load %arg1[%c0_1, %c0_2] : memref<32x128xbf16, #tpu.memory_space<vmem>>, vector<32x128xbf16>
    %cst = arith.constant dense<0.000000e+00> : vector<8x128xf32>
    %3 = tpu.matmul %1, %2, %cst {dimension_numbers = #tpu.dot_dimension_numbers<[1], [0], [0], [1], [0, 0, 1, 1], [], []>} : vector<8x32xbf16>, vector<32x128xbf16>, vector<8x128xf32> -> vector<8x128xf32>
    %c0_3 = arith.constant 0 : index
    %c0_4 = arith.constant 0 : index
    %4 = vector.load %arg2[%c0_3, %c0_4] : memref<1x128xf32, #tpu.memory_space<vmem>>, vector<1x128xf32>
    %5 = vector.broadcast %4 : vector<1x128xf32> to vector<8x128xf32>
    %6 = arith.addf %3, %5 : vector<8x128xf32>
    %cst_5 = arith.constant 0.000000e+00 : f32
    %7 = vector.broadcast %cst_5 : f32 to vector<8x128xf32>
    %8 = arith.maximumf %6, %7 : vector<8x128xf32>
    %9 = arith.truncf %8 : vector<8x128xf32> to vector<8x128xbf16>
    %c0_6 = arith.constant 0 : index
    %c0_7 = arith.constant 0 : index
    %10 = vector.load %arg3[%c0_6, %c0_7] : memref<128x64xbf16, #tpu.memory_space<vmem>>, vector<128x64xbf16>
    %cst_8 = arith.constant dense<0.000000e+00> : vector<8x64xf32>
    %11 = tpu.matmul %9, %10, %cst_8 {dimension_numbers = #tpu.dot_dimension_numbers<[1], [0], [0], [1], [0, 0, 1, 1], [], []>} : vector<8x128xbf16>, vector<128x64xbf16>, vector<8x64xf32> -> vector<8x64xf32>
    %c0_9 = arith.constant 0 : index
    %c0_10 = arith.constant 0 : index
    %12 = vector.load %arg4[%c0_9, %c0_10] : memref<1x64xf32, #tpu.memory_space<vmem>>, vector<1x64xf32>
    %13 = vector.broadcast %12 : vector<1x64xf32> to vector<8x64xf32>
    %14 = arith.addf %11, %13 : vector<8x64xf32>
    %cst_11 = arith.constant 0.000000e+00 : f32
    %15 = vector.broadcast %cst_11 : f32 to vector<8x64xf32>
    %16 = arith.maximumf %14, %15 : vector<8x64xf32>
    %17 = arith.truncf %16 : vector<8x64xf32> to vector<8x64xbf16>
    %c0_12 = arith.constant 0 : index
    %c0_13 = arith.constant 0 : index
    %18 = vector.load %arg5[%c0_12, %c0_13] : memref<64x4xbf16, #tpu.memory_space<vmem>>, vector<64x4xbf16>
    %cst_14 = arith.constant dense<0.000000e+00> : vector<8x4xf32>
    %19 = tpu.matmul %17, %18, %cst_14 {dimension_numbers = #tpu.dot_dimension_numbers<[1], [0], [0], [1], [0, 0, 1, 1], [], []>} : vector<8x64xbf16>, vector<64x4xbf16>, vector<8x4xf32> -> vector<8x4xf32>
    %c0_15 = arith.constant 0 : index
    %c0_16 = arith.constant 0 : index
    %20 = vector.load %arg6[%c0_15, %c0_16] : memref<1x4xf32, #tpu.memory_space<vmem>>, vector<1x4xf32>
    %21 = vector.broadcast %20 : vector<1x4xf32> to vector<8x4xf32>
    %22 = arith.addf %19, %21 : vector<8x4xf32>
    %c0_17 = arith.constant 0 : index
    %c0_18 = arith.constant 0 : index
    %23 = vector.load %arg7[%c0_17, %c0_18] : memref<8x4xf32, #tpu.memory_space<vmem>>, vector<8x4xf32>
    tpu.vector_store %arg7[%c0_17, %c0_18], %22 {strides = array<i32>} : memref<8x4xf32, #tpu.memory_space<vmem>>, vector<8x4xf32>,
    return
  }
}

</mosaic_0001>

<llo_original>
// kernel: simple_nn_forward.1
$region0: #{simple_nn_forward.1}
  #allocation0 [shape = 'u32[]', space=smem, size = 0x4, offset = 0x4, fixed_abs, tag = 'smem constant byte address 0x4 - core index']
  #allocation1 [shape = 'u32[144,128]{1,0:T(1,128)}', space=vmem, size = 0x12000, scoped, tag = 'internal scratch']
  %s0 = inlined_call_operand.vmem [shape: f32[8,32], index: 0, kind: input, shape index: {}]
  %s1 = inlined_call_operand.vmem [shape: bf16[32,128], index: 1, kind: input, shape index: {}]
  %s2 = inlined_call_operand.vmem [shape: f32[1,128], index: 2, kind: input, shape index: {}]
  %s3 = inlined_call_operand.vmem [shape: bf16[128,64], index: 3, kind: input, shape index: {}]
  %s4 = inlined_call_operand.vmem [shape: f32[1,64], index: 4, kind: input, shape index: {}]
  %s5 = inlined_call_operand.vmem [shape: bf16[64,4], index: 5, kind: input, shape index: {}]
  %s6 = inlined_call_operand.vmem [shape: f32[1,4], index: 6, kind: input, shape index: {}]
  %s7 = inlined_call_operand.vmem [shape: f32[8,4], index: 7, kind: output, shape index: {}]
  %s8 = sld [smem:[#allocation0]]
  $region38: #{simple_nn_forward.1} parent=0
    _
  %s10 = ssub.s32 1, %s8
  %s11 = scalar_select 0, %s10, %s8
  // Predicated region
  $region2: #{simple_nn_forward.1} parent=0 // pred_check
    _
  $region3: #{simple_nn_forward.1} parent=0 // pred_check_branch
    %13 = sbr.rel (0) target = $region5
  $region4: #{simple_nn_forward.1} parent=0 // pred_region
    _
  $region5: #{simple_nn_forward.1} parent=0 // pred_fallthru
    _
  // Predicated region
  $region6: #{simple_nn_forward.1} parent=0 // pred_check
    _
  $region7: #{simple_nn_forward.1} parent=0 // pred_check_branch
    %15 = sbr.rel (0) target = $region9
  $region8: #{simple_nn_forward.1} parent=0 // pred_region
    _
  $region9: #{simple_nn_forward.1} parent=0 // pred_fallthru
    _
  // Predicated region
  $region10: #{simple_nn_forward.1} parent=0 // pred_check
    _
  $region11: #{simple_nn_forward.1} parent=0 // pred_check_branch
    %17 = sbr.rel (0) target = $region13
  $region12: #{simple_nn_forward.1} parent=0 // pred_region
    _
  $region13: #{simple_nn_forward.1} parent=0 // pred_fallthru
    _
  // Predicated region
  $region14: #{simple_nn_forward.1} parent=0 // pred_check
    _
  $region15: #{simple_nn_forward.1} parent=0 // pred_check_branch
    %19 = sbr.rel (0) target = $region17
  $region16: #{simple_nn_forward.1} parent=0 // pred_region
    _
  $region17: #{simple_nn_forward.1} parent=0 // pred_fallthru
    _
  // Predicated region
  $region18: #{simple_nn_forward.1} parent=0 // pred_check
    _
  $region19: #{simple_nn_forward.1} parent=0 // pred_check_branch
    %21 = sbr.rel (0) target = $region21
  $region20: #{simple_nn_forward.1} parent=0 // pred_region
    _
  $region21: #{simple_nn_forward.1} parent=0 // pred_fallthru
    _
  // Predicated region
  $region22: #{simple_nn_forward.1} parent=0 // pred_check
    _
  $region23: #{simple_nn_forward.1} parent=0 // pred_check_branch
    %23 = sbr.rel (0) target = $region25
  $region24: #{simple_nn_forward.1} parent=0 // pred_region
    _
  $region25: #{simple_nn_forward.1} parent=0 // pred_fallthru
    _
  // Predicated region
  $region26: #{simple_nn_forward.1} parent=0 // pred_check
    _
  $region27: #{simple_nn_forward.1} parent=0 // pred_check_branch
    %25 = sbr.rel (0) target = $region29
  $region28: #{simple_nn_forward.1} parent=0 // pred_region
    _
  $region29: #{simple_nn_forward.1} parent=0 // pred_fallthru
    _
  %v27 = vld [vmem:[%s0] sm:$0xff]
  %v28 = vpack.c.bf16 %v27, %v27
  %v29 = vld [vmem:[%s1] sm:$0xf]
  %v30 = vld [vmem:[%s1 + $0x4] sm:$0xf]
  %v31 = vld [vmem:[%s1 + $0x8] sm:$0xf]
  %v32 = vld [vmem:[%s1 + $0xc] sm:$0xf]
  %v33 = vld [vmem:[%s2] sm:$0x1]
  %v35 = vlaneseq
  %v36 = vshrl.u32 %v35, 7
  %v37 = vsub.s32 0, %v36
  %v38 = vrot.slane %v33, %v37
  %v44 = vunpack.c.l.b16 %v29
  %v45 = vunpack.c.l.b16 %v30
  %v46 = vunpack.c.l.b16 %v31
  %v47 = vunpack.c.l.b16 %v32
  %v48 = vpack.c.b16 %v45, %v44
  %v49 = vpack.c.b16 %v47, %v46
  %vm52 = vcmask 261120
  %v54 = vsel %vm52, %v28, 0
  %56 = vmatprep.subr.bf16.mxu0 0
  %57 = vmatpush1.bf16.msra.mxu0 %v48
  %58 = vmatprep.subr.bf16.mxu0 0
  %59 = vmatpush1.bf16.msra.mxu0 %v49
  %60 = vmatprep.subr.bf16.mxu0 0
  %61 = vmatpush1.bf16.msra.mxu0 0
  %62 = vmatprep.subr.bf16.mxu0 0
  %63 = vmatpush1.bf16.msra.mxu0 0
  %64 = vmatprep.subr.bf16.mxu0 0
  %65 = vmatpush1.bf16.msra.mxu0 0
  %66 = vmatprep.subr.bf16.mxu0 0
  %67 = vmatpush1.bf16.msra.mxu0 0
  %68 = vmatprep.subr.bf16.mxu0 0
  %69 = vmatpush1.bf16.msra.mxu0 0
  %70 = vmatprep.subr.bf16.mxu0 0
  %71 = vmatpush1.bf16.msra.mxu0 0
  %72 = vmatprep.subr.bf16.mxu0 0
  %73 = vmatpush1.bf16.msra.mxu0 0
  %74 = vmatprep.subr.bf16.mxu0 0
  %75 = vmatpush1.bf16.msra.mxu0 0
  %76 = vmatprep.subr.bf16.mxu0 0
  %77 = vmatpush1.bf16.msra.mxu0 0
  %78 = vmatprep.subr.bf16.mxu0 0
  %79 = vmatpush1.bf16.msra.mxu0 0
  %80 = vmatprep.subr.bf16.mxu0 0
  %81 = vmatpush1.bf16.msra.mxu0 0
  %82 = vmatprep.subr.bf16.mxu0 0
  %83 = vmatpush1.bf16.msra.mxu0 0
  %84 = vmatprep.subr.bf16.mxu0 0
  %85 = vmatpush1.bf16.msra.mxu0 0
  %86 = vmatprep.subr.bf16.mxu0 0
  %87 = vmatpush1.bf16.msra.mxu0 0
  %88 = vmatprep.mubr.bf16.mxu0 0
  %89 = vmatmul.mubr.bf16.gmra.mrb[0].mxu0 %v54
  %v90 = vpop.f32.mrb[0].mxu0
  %v91 = vadd.f32 %v38, %v90
  %v92 = vpop.f32.mrb[0].mxu0
  %v93 = vpop.f32.mrb[0].mxu0
  %v94 = vpop.f32.mrb[0].mxu0
  %95 = vdwg.mxu0
  %v96 = vmax.f32 %v91, 0.0
  %v97 = vpack.c.bf16 %v96, %v96
  %v98 = vld [vmem:[%s3] sm:$0xf]
  %v99 = vld [vmem:[%s3 + $0x4] sm:$0xf]
  %v100 = vld [vmem:[%s3 + $0x8] sm:$0xf]
  %v101 = vld [vmem:[%s3 + $0xc] sm:$0xf]
  %v102 = vld [vmem:[%s3 + $0x10] sm:$0xf]
  %v103 = vld [vmem:[%s3 + $0x14] sm:$0xf]
  %v104 = vld [vmem:[%s3 + $0x18] sm:$0xf]
  %v105 = vld [vmem:[%s3 + $0x1c] sm:$0xf]
  %v106 = vld [vmem:[%s3 + $0x20] sm:$0xf]
  %v107 = vld [vmem:[%s3 + $0x24] sm:$0xf]
  %v108 = vld [vmem:[%s3 + $0x28] sm:$0xf]
  %v109 = vld [vmem:[%s3 + $0x2c] sm:$0xf]
  %v110 = vld [vmem:[%s3 + $0x30] sm:$0xf]
  %v111 = vld [vmem:[%s3 + $0x34] sm:$0xf]
  %v112 = vld [vmem:[%s3 + $0x38] sm:$0xf]
  %v113 = vld [vmem:[%s3 + $0x3c] sm:$0xf]
  %v114 = vld [vmem:[%s4] sm:$0x1]
  %v116 = vlaneseq
  %v117 = vshrl.u32 %v116, 7
  %v118 = vsub.s32 0, %v117
  %v119 = vrot.slane %v114, %v118
  %v137 = vunpack.c.l.b16 %v98
  %v138 = vunpack.c.l.b16 %v99
  %v139 = vunpack.c.l.b16 %v100
  %v140 = vunpack.c.l.b16 %v101
  %v141 = vunpack.c.l.b16 %v102
  %v142 = vunpack.c.l.b16 %v103
  %v143 = vunpack.c.l.b16 %v104
  %v144 = vunpack.c.l.b16 %v105
  %v145 = vunpack.c.l.b16 %v106
  %v146 = vunpack.c.l.b16 %v107
  %v147 = vunpack.c.l.b16 %v108
  %v148 = vunpack.c.l.b16 %v109
  %v149 = vunpack.c.l.b16 %v110
  %v150 = vunpack.c.l.b16 %v111
  %v151 = vunpack.c.l.b16 %v112
  %v152 = vunpack.c.l.b16 %v113
  %v153 = vpack.c.b16 %v138, %v137
  %v154 = vpack.c.b16 %v140, %v139
  %v155 = vpack.c.b16 %v142, %v141
  %v156 = vpack.c.b16 %v144, %v143
  %v157 = vpack.c.b16 %v146, %v145
  %v158 = vpack.c.b16 %v148, %v147
  %v159 = vpack.c.b16 %v150, %v149
  %v160 = vpack.c.b16 %v152, %v151
  %169 = vmatprep.subr.bf16.mxu0 0
  %170 = vmatpush1.bf16.msra.mxu0 %v153
  %171 = vmatprep.subr.bf16.mxu0 0
  %172 = vmatpush1.bf16.msra.mxu0 %v154
  %173 = vmatprep.subr.bf16.mxu0 0
  %174 = vmatpush1.bf16.msra.mxu0 %v155
  %175 = vmatprep.subr.bf16.mxu0 0
  %176 = vmatpush1.bf16.msra.mxu0 %v156
  %177 = vmatprep.subr.bf16.mxu0 0
  %178 = vmatpush1.bf16.msra.mxu0 %v157
  %179 = vmatprep.subr.bf16.mxu0 0
  %180 = vmatpush1.bf16.msra.mxu0 %v158
  %181 = vmatprep.subr.bf16.mxu0 0
  %182 = vmatpush1.bf16.msra.mxu0 %v159
  %183 = vmatprep.subr.bf16.mxu0 0
  %184 = vmatpush1.bf16.msra.mxu0 %v160
  %185 = vmatprep.subr.bf16.mxu0 0
  %186 = vmatpush1.bf16.msra.mxu0 0
  %187 = vmatprep.subr.bf16.mxu0 0
  %188 = vmatpush1.bf16.msra.mxu0 0
  %189 = vmatprep.subr.bf16.mxu0 0
  %190 = vmatpush1.bf16.msra.mxu0 0
  %191 = vmatprep.subr.bf16.mxu0 0
  %192 = vmatpush1.bf16.msra.mxu0 0
  %193 = vmatprep.subr.bf16.mxu0 0
  %194 = vmatpush1.bf16.msra.mxu0 0
  %195 = vmatprep.subr.bf16.mxu0 0
  %196 = vmatpush1.bf16.msra.mxu0 0
  %197 = vmatprep.subr.bf16.mxu0 0
  %198 = vmatpush1.bf16.msra.mxu0 0
  %199 = vmatprep.subr.bf16.mxu0 0
  %200 = vmatpush1.bf16.msra.mxu0 0
  %201 = vmatprep.mubr.bf16.mxu0 0
  %202 = vmatmul.mubr.bf16.gmra.mrb[0].mxu0 %v97
  %v203 = vpop.f32.mrb[0].mxu0
  %v204 = vadd.f32 %v119, %v203
  %v205 = vpop.f32.mrb[0].mxu0
  %v206 = vpop.f32.mrb[0].mxu0
  %v207 = vpop.f32.mrb[0].mxu0
  %208 = vdwg.mxu0
  %v209 = vmax.f32 %v204, 0.0
  %v210 = vpack.c.bf16 %v209, %v209
  %v211 = vld [vmem:[%s5] sm:$0xf]
  %v212 = vld [vmem:[%s5 + $0x4] sm:$0xf]
  %v213 = vld [vmem:[%s5 + $0x8] sm:$0xf]
  %v214 = vld [vmem:[%s5 + $0xc] sm:$0xf]
  %v215 = vld [vmem:[%s5 + $0x10] sm:$0xf]
  %v216 = vld [vmem:[%s5 + $0x14] sm:$0xf]
  %v217 = vld [vmem:[%s5 + $0x18] sm:$0xf]
  %v218 = vld [vmem:[%s5 + $0x1c] sm:$0xf]
  %v219 = vld [vmem:[%s6] sm:$0x1]
  %v221 = vlaneseq
  %v222 = vshrl.u32 %v221, 7
  %v223 = vsub.s32 0, %v222
  %v224 = vrot.slane %v219, %v223
  %v234 = vunpack.c.l.b16 %v211
  %v235 = vunpack.c.l.b16 %v212
  %v236 = vunpack.c.l.b16 %v213
  %v237 = vunpack.c.l.b16 %v214
  %v238 = vunpack.c.l.b16 %v215
  %v239 = vunpack.c.l.b16 %v216
  %v240 = vunpack.c.l.b16 %v217
  %v241 = vunpack.c.l.b16 %v218
  %v242 = vpack.c.b16 %v235, %v234
  %v243 = vpack.c.b16 %v237, %v236
  %v244 = vpack.c.b16 %v239, %v238
  %v245 = vpack.c.b16 %v241, %v240
  %vm250 = vcmask 523264
  %v252 = vsel %vm250, %v210, 0
  %254 = vmatprep.subr.bf16.mxu0 0
  %255 = vmatpush1.bf16.msra.mxu0 %v242
  %256 = vmatprep.subr.bf16.mxu0 0
  %257 = vmatpush1.bf16.msra.mxu0 %v243
  %258 = vmatprep.subr.bf16.mxu0 0
  %259 = vmatpush1.bf16.msra.mxu0 %v244
  %260 = vmatprep.subr.bf16.mxu0 0
  %261 = vmatpush1.bf16.msra.mxu0 %v245
  %262 = vmatprep.subr.bf16.mxu0 0
  %263 = vmatpush1.bf16.msra.mxu0 0
  %264 = vmatprep.subr.bf16.mxu0 0
  %265 = vmatpush1.bf16.msra.mxu0 0
  %266 = vmatprep.subr.bf16.mxu0 0
  %267 = vmatpush1.bf16.msra.mxu0 0
  %268 = vmatprep.subr.bf16.mxu0 0
  %269 = vmatpush1.bf16.msra.mxu0 0
  %270 = vmatprep.subr.bf16.mxu0 0
  %271 = vmatpush1.bf16.msra.mxu0 0
  %272 = vmatprep.subr.bf16.mxu0 0
  %273 = vmatpush1.bf16.msra.mxu0 0
  %274 = vmatprep.subr.bf16.mxu0 0
  %275 = vmatpush1.bf16.msra.mxu0 0
  %276 = vmatprep.subr.bf16.mxu0 0
  %277 = vmatpush1.bf16.msra.mxu0 0
  %278 = vmatprep.subr.bf16.mxu0 0
  %279 = vmatpush1.bf16.msra.mxu0 0
  %280 = vmatprep.subr.bf16.mxu0 0
  %281 = vmatpush1.bf16.msra.mxu0 0
  %282 = vmatprep.subr.bf16.mxu0 0
  %283 = vmatpush1.bf16.msra.mxu0 0
  %284 = vmatprep.subr.bf16.mxu0 0
  %285 = vmatpush1.bf16.msra.mxu0 0
  %286 = vmatprep.mubr.bf16.mxu0 0
  %287 = vmatmul.mubr.bf16.gmra.mrb[0].mxu0 %v252
  %v288 = vpop.f32.mrb[0].mxu0
  %v289 = vadd.f32 %v224, %v288
  %v290 = vpop.f32.mrb[0].mxu0
  %v291 = vpop.f32.mrb[0].mxu0
  %v292 = vpop.f32.mrb[0].mxu0
  %293 = vdwg.mxu0
  %vm294 = vcmask 31744
  %295 = vst.msk [vmem:[%s7] sm:$0xff] %vm294, %v289
  // Predicated region
  $region30: #{simple_nn_forward.1} parent=0 // pred_check
    _
  $region31: #{simple_nn_forward.1} parent=0 // pred_check_branch
    %297 = sbr.rel (0) target = $region33
  $region32: #{simple_nn_forward.1} parent=0 // pred_region
    _
  $region33: #{simple_nn_forward.1} parent=0 // pred_fallthru
    _
  // Predicated region
  $region34: #{simple_nn_forward.1} parent=0 // pred_check
    _
  $region35: #{simple_nn_forward.1} parent=0 // pred_check_branch
    %299 = sbr.rel (0) target = $region37
  $region36: #{simple_nn_forward.1} parent=0 // pred_region
    _
  $region37: #{simple_nn_forward.1} parent=0 // pred_fallthru
    _

</llo_original>
